<compile_context>
chip_gen: v5e
topology: v5e:2x2
jax: 0.10.0
libtpu: 0.0.40
codegen_flags: <defaults>
</compile_context>

<pallas_src>
import functools

import jax
import jax.numpy as jnp
from jax import lax
from jax.experimental import pallas as pl
from jax.experimental.pallas import tpu as pltpu

_LANES = 128
_SUBLANES = 8


def _focal_loss_kernel(y_true_ref, y_pred_ref, out_ref, *, gamma, ma_alpha,
                       valid_len, tile_positions, apply_mask):
    eps = jnp.float32(1e-07)
    one = jnp.float32(1.0)

    yt = y_true_ref[...].astype(jnp.float32)                        # (N, C, 128)
    yp = jnp.clip(y_pred_ref[...].astype(jnp.float32), eps, one - eps)
    n, c, l = yt.shape

    # label_cont = sum(y_true[:4], dim=0); alpha = where(label_cont == 1, a, 1-a)
    label_cont = jnp.sum(yt[:4], axis=0)                            # (C, 128)
    alpha = jnp.where(label_cont == one,
                      jnp.float32(ma_alpha), jnp.float32(1.0 - ma_alpha))

    if apply_mask:
        # Zero the padded tail positions (code only emitted when padding exists).
        base = pl.program_id(0) * tile_positions
        pos = base + (lax.broadcasted_iota(jnp.int32, (c, l), 0) * l
                      + lax.broadcasted_iota(jnp.int32, (c, l), 1))
        alpha = jnp.where(pos < valid_len, alpha, jnp.float32(0.0))

    # Single select per element:  1 - pt = where(y_true == 1, y_pred, 1 - y_pred)
    one_minus_pt = jnp.where(yt == one, yp, one - yp)
    pt = one - one_minus_pt

    if float(gamma) == 2.0:
        pt_g = pt * pt
    elif float(gamma) == 1.0:
        pt_g = pt
    else:
        pt_g = jnp.exp(jnp.float32(gamma) * jnp.log(pt))            # pt > 0 post-clamp

    per_elem = pt_g * jnp.log(one_minus_pt)                         # (N, C, 128)

    # Reduce the batch dim first (VPU adds), THEN apply the (C,128) alpha once.
    inner = jnp.sum(per_elem, axis=0)                               # (C, 128)
    contrib2d = alpha * inner                                       # (C, 128)

    # Fold the tile into one (8, 128) vreg-shaped partial; the cross-lane /
    # cross-sublane reduce happens once, outside the kernel.
    out_ref[0] = jnp.sum(contrib2d.reshape(c // _SUBLANES, _SUBLANES, l), axis=0)


def focal_loss(y_true, y_pred, gamma=2, ma_alpha=0.75, tile_chunks=512):
    """Pallas equivalent of Focal_Loss.forward(y_true, y_pred, gamma).

    y_true may be float / int8 / bool (0/1 labels); y_pred may be f32 or bf16
    (both are upcast to f32 inside the kernel).  gamma / ma_alpha are static.
    """
    assert y_true.shape == y_pred.shape and y_true.ndim == 3
    n_batch, h, w = y_true.shape
    if y_true.dtype == jnp.bool_:
        y_true = y_true.astype(jnp.int8)
    L = h * w

    # Lane-dense layout: 128-position chunks; chunk granularity 32 keeps the
    # block sublane dim valid for f32 / bf16 / int8 tilings.
    gran = 32
    c_total = pl.cdiv(L, _LANES)
    tc = max(gran, min(int(tile_chunks), ((c_total + gran - 1) // gran) * gran))
    tc = (tc // gran) * gran
    num_tiles = pl.cdiv(c_total, tc)
    c_pad = num_tiles * tc
    l_pad = c_pad * _LANES

    yt = y_true.reshape(n_batch, L)
    yp = y_pred.reshape(n_batch, L)
    if l_pad != L:
        yt = jnp.pad(yt, ((0, 0), (0, l_pad - L)))
        yp = jnp.pad(yp, ((0, 0), (0, l_pad - L)))
    yt = yt.reshape(n_batch, c_pad, _LANES)
    yp = yp.reshape(n_batch, c_pad, _LANES)

    kernel = functools.partial(
        _focal_loss_kernel,
        gamma=float(gamma), ma_alpha=float(ma_alpha),
        valid_len=int(L), tile_positions=int(tc * _LANES),
        apply_mask=bool(l_pad != L),
    )

    partials = pl.pallas_call(
        kernel,
        out_shape=jax.ShapeDtypeStruct((num_tiles, _SUBLANES, _LANES), jnp.float32),
        grid=(num_tiles,),
        in_specs=[
            pl.BlockSpec((n_batch, tc, _LANES), lambda i: (0, i, 0)),
            pl.BlockSpec((n_batch, tc, _LANES), lambda i: (0, i, 0)),
        ],
        out_specs=pl.BlockSpec((1, _SUBLANES, _LANES), lambda i: (i, 0, 0)),
        compiler_params=pltpu.CompilerParams(
            dimension_semantics=("parallel",),
            vmem_limit_bytes=48 * 1024 * 1024,
        ),
    )(yt, yp)

    # One cheap XLA reduce: -(global sum) / N == mean over per-batch row sums.
    return -jnp.sum(partials) / jnp.float32(n_batch)


def _focal_loss_ref(y_true, y_pred, gamma=2, ma_alpha=0.75):
    """Pure-JAX reference (mirrors the PyTorch code 1:1) for validation."""
    eps = 1e-07
    y_pred = jnp.clip(y_pred, eps, 1 - eps)
    label_cont = jnp.sum(y_true[:4], axis=0)
    alpha = jnp.where(label_cont == 1, ma_alpha, 1 - ma_alpha)
    pt = jnp.where(y_true == 1, 1 - y_pred, y_pred)
    loss = -jnp.sum(alpha * jnp.power(pt, gamma) * jnp.log(1 - pt), axis=(1, 2))
    return jnp.mean(loss)


if __name__ == "__main__":
    key = jax.random.PRNGKey(0)
    k1, k2, k3, k4 = jax.random.split(key, 4)

    # Case 1: lane-aligned shape, multi-tile ("parallel") grid, reduced-precision
    # inputs (int8 labels + bf16 predictions -> less HBM traffic).
    N, H, W = 8, 64, 128
    y_true = (jax.random.uniform(k1, (N, H, W)) > 0.5).astype(jnp.int8)
    y_pred = jax.random.uniform(k2, (N, H, W), dtype=jnp.float32).astype(jnp.bfloat16)

    out = jax.block_until_ready(focal_loss(y_true, y_pred, gamma=2, tile_chunks=32))
    ref = jax.block_until_ready(
        _focal_loss_ref(y_true.astype(jnp.float32), y_pred.astype(jnp.float32), gamma=2))
    assert jnp.allclose(out, ref, rtol=1e-4, atol=1e-4), (out, ref)

    # Case 2: ragged spatial size (needs padding + in-kernel masking), f32 inputs,
    # batch size not a multiple of 8.
    N2, H2, W2 = 5, 24, 40
    y_true2 = (jax.random.uniform(k3, (N2, H2, W2)) > 0.5).astype(jnp.float32)
    y_pred2 = jax.random.uniform(k4, (N2, H2, W2), dtype=jnp.float32)

    out2 = jax.block_until_ready(focal_loss(y_true2, y_pred2, gamma=2))
    ref2 = jax.block_until_ready(_focal_loss_ref(y_true2, y_pred2, gamma=2))
    assert jnp.allclose(out2, ref2, rtol=1e-4, atol=1e-4), (out2, ref2)

    # Case 3: non-default gamma exercises the general exp(gamma * log(pt)) path.
    out3 = jax.block_until_ready(focal_loss(y_true2, y_pred2, gamma=3))
    ref3 = jax.block_until_ready(_focal_loss_ref(y_true2, y_pred2, gamma=3))
    assert jnp.allclose(out3, ref3, rtol=1e-4, atol=1e-4), (out3, ref3)

    print("KERNEL_OK")
</pallas_src>

<mosaic_0001>
module attributes {stable_mosaic.version = 11 : i64} {
  func.func @_focal_loss_kernel(%arg0: i32, %arg1: memref<8x32x128xi8, #tpu.memory_space<vmem>>, %arg2: memref<8x32x128xbf16, #tpu.memory_space<vmem>>, %arg3: memref<1x8x128xf32, #tpu.memory_space<vmem>>) attributes {dimension_semantics = [#tpu.dimension_semantics<parallel>], iteration_bounds = array<i64: 2>, scalar_prefetch = 0 : i64, scratch_operands = 0 : i64, tpu.core_type = #tpu.core_type<tc>, window_params = [{transform_indices = @transform_0, window_bounds = array<i64: 8, 32, 128>}, {transform_indices = @transform_1, window_bounds = array<i64: 8, 32, 128>}, {transform_indices = @transform_2, window_bounds = array<i64: 1, 8, 128>}]} {
    %c0 = arith.constant 0 : index
    %c0_0 = arith.constant 0 : index
    %c0_1 = arith.constant 0 : index
    %0 = vector.load %arg1[%c0, %c0_0, %c0_1] : memref<8x32x128xi8, #tpu.memory_space<vmem>>, vector<8x32x128xi8>
    %1 = arith.sitofp %0 : vector<8x32x128xi8> to vector<8x32x128xf32>
    %c0_2 = arith.constant 0 : index
    %c0_3 = arith.constant 0 : index
    %c0_4 = arith.constant 0 : index
    %2 = vector.load %arg2[%c0_2, %c0_3, %c0_4] : memref<8x32x128xbf16, #tpu.memory_space<vmem>>, vector<8x32x128xbf16>
    %3 = arith.extf %2 : vector<8x32x128xbf16> to vector<8x32x128xf32>
    %cst = arith.constant 1.000000e+00 : f32
    %cst_5 = arith.constant 1.000000e-07 : f32
    %4 = arith.subf %cst, %cst_5 : f32
    %cst_6 = arith.constant 1.000000e-07 : f32
    %5 = vector.broadcast %cst_6 : f32 to vector<8x32x128xf32>
    %6 = arith.maximumf %5, %3 : vector<8x32x128xf32>
    %7 = vector.broadcast %4 : f32 to vector<8x32x128xf32>
    %8 = arith.minimumf %7, %6 : vector<8x32x128xf32>
    %9 = vector.extract_strided_slice %1 {offsets = [0, 0, 0], sizes = [4, 32, 128], strides = [1, 1, 1]} : vector<8x32x128xf32> to vector<4x32x128xf32>
    %cst_7 = arith.constant dense<0.000000e+00> : vector<32x128xf32>
    %10 = vector.multi_reduction <add>, %9, %cst_7 [0] : vector<4x32x128xf32> to vector<32x128xf32>
    %cst_8 = arith.constant 1.000000e+00 : f32
    %11 = vector.broadcast %cst_8 : f32 to vector<32x128xf32>
    %12 = arith.cmpf oeq, %10, %11 : vector<32x128xf32>
    %cst_9 = arith.constant 7.500000e-01 : f32
    %cst_10 = arith.constant 2.500000e-01 : f32
    %13 = vector.broadcast %cst_9 : f32 to vector<32x128xf32>
    %14 = vector.broadcast %cst_10 : f32 to vector<32x128xf32>
    %15 = arith.select %12, %13, %14 : vector<32x128xi1>, vector<32x128xf32>
    %cst_11 = arith.constant 1.000000e+00 : f32
    %16 = vector.broadcast %cst_11 : f32 to vector<8x32x128xf32>
    %17 = arith.cmpf oeq, %1, %16 : vector<8x32x128xf32>
    %cst_12 = arith.constant 1.000000e+00 : f32
    %18 = vector.broadcast %cst_12 : f32 to vector<8x32x128xf32>
    %19 = arith.subf %18, %8 : vector<8x32x128xf32>
    %20 = arith.select %17, %8, %19 : vector<8x32x128xi1>, vector<8x32x128xf32>
    %cst_13 = arith.constant 1.000000e+00 : f32
    %21 = vector.broadcast %cst_13 : f32 to vector<8x32x128xf32>
    %22 = arith.subf %21, %20 : vector<8x32x128xf32>
    %23 = arith.mulf %22, %22 : vector<8x32x128xf32>
    %24 = math.log %20 : vector<8x32x128xf32>
    %25 = arith.mulf %23, %24 : vector<8x32x128xf32>
    %cst_14 = arith.constant dense<0.000000e+00> : vector<32x128xf32>
    %26 = vector.multi_reduction <add>, %25, %cst_14 [0] : vector<8x32x128xf32> to vector<32x128xf32>
    %27 = arith.mulf %15, %26 : vector<32x128xf32>
    %28 = vector.shape_cast %27 : vector<32x128xf32> to vector<4x8x128xf32>
    %cst_15 = arith.constant dense<0.000000e+00> : vector<8x128xf32>
    %29 = vector.multi_reduction <add>, %28, %cst_15 [0] : vector<4x8x128xf32> to vector<8x128xf32>
    %c0_16 = arith.constant 0 : index
    %c0_17 = arith.constant 0 : index
    %c0_18 = arith.constant 0 : index
    %30 = vector.load %arg3[%c0_16, %c0_17, %c0_18] : memref<1x8x128xf32, #tpu.memory_space<vmem>>, vector<1x8x128xf32>
    %31 = vector.shape_cast %30 : vector<1x8x128xf32> to vector<8x128xf32>
    %32 = vector.shape_cast %29 : vector<8x128xf32> to vector<1x8x128xf32>
    tpu.vector_store %arg3[%c0_16, %c0_17, %c0_18], %32 {strides = array<i32>} : memref<1x8x128xf32, #tpu.memory_space<vmem>>, vector<1x8x128xf32>,
    return
  }
  func.func @transform_0(%arg0: i32) -> (i32, i32, i32) {
    %c0_i32 = arith.constant 0 : i32
    %c0_i32_0 = arith.constant 0 : i32
    %c0_i32_1 = arith.constant 0 : i32
    return %c0_i32, %arg0, %c0_i32_0 : i32, i32, i32
  }
  func.func @transform_1(%arg0: i32) -> (i32, i32, i32) {
    %c0_i32 = arith.constant 0 : i32
    %c0_i32_0 = arith.constant 0 : i32
    %c0_i32_1 = arith.constant 0 : i32
    return %c0_i32, %arg0, %c0_i32_0 : i32, i32, i32
  }
  func.func @transform_2(%arg0: i32) -> (i32, i32, i32) {
    %c0_i32 = arith.constant 0 : i32
    %c0_i32_0 = arith.constant 0 : i32
    %c0_i32_1 = arith.constant 0 : i32
    return %arg0, %c0_i32, %c0_i32_0 : i32, i32, i32
  }
}

</mosaic_0001>

<llo_original>
// kernel: tpu_custom_call.1
$region0: #{tpu_custom_call.1}
  #allocation0 [shape = 'u32[]', space=smem, size = 0x4, offset = 0x4, fixed_abs, tag = 'smem constant byte address 0x4 - core index']
  #allocation1 [shape = 'u32[72,128]{1,0:T(1,128)}', space=vmem, size = 0x9000, scoped, tag = 'internal scratch']
  #allocation8 [shape = 's32[]', space=sflag, size = 0x4, offset = 0, fixed_abs, tag = 'sflag constant byte address 0x0 - dummy sync flag']
  %s0 = inlined_call_operand.hbm [shape: s8[8,64,128], index: 0, kind: input, shape index: {}]
  %s1 = inlined_call_operand.hbm [shape: bf16[8,64,128], index: 1, kind: input, shape index: {}]
  %s2 = inlined_call_operand.hbm [shape: f32[2,8,128], index: 2, kind: output, shape index: {}]
  %s3 = sld [smem:[#allocation0]]
  $region49: #{tpu_custom_call.1} parent=0
    _
  %s5 = ssub.s32 1, %s3
  %s6 = scalar_select 0, %s5, %s3
  $region1: #{tpu_custom_call.1} parent=0
    #allocation2 [shape = 'u8[65536]{0}', space=vmem, size = 0x10000, scoped, tag = 'input window, operand 0']
    #allocation3 [shape = 's32[2]{0}', space=sflag, size = 0x8, scoped, tag = 'scoped memory for tpu_custom_call.1']
    #allocation4 [shape = 's32[2]{0}', space=sflag, size = 0x8, scoped, tag = 'scoped memory for tpu_custom_call.1']
    #allocation5 [shape = 'u8[131072]{0}', space=vmem, size = 0x20000, scoped, tag = 'input window, operand 1']
    #allocation6 [shape = 's32[2]{0}', space=sflag, size = 0x8, scoped, tag = 'scoped memory for tpu_custom_call.1']
    #allocation7 [shape = 'u8[8192]{0}', space=vmem, size = 0x2000, scoped, tag = 'output window, operand 0']
    %7 = vsyncpa [#allocation3], 0
    %s8 = scalar_lea.sflag [#allocation3], 1
    %9 = vsyncpa %s8, 0
    %10 = vsyncpa [#allocation6], 0
    %s11 = scalar_lea.sflag [#allocation6], 1
    %12 = vsyncpa %s11, 0
    %13 = vsyncpa [#allocation4], 0
    %s14 = scalar_lea.sflag [#allocation4], 1
    %15 = vsyncpa %s14, 0
    loop: start=0, step=1, limit=4
    $region2: #{tpu_custom_call.1} parent=1 // loop_pre_header
      _
    $region3: #{tpu_custom_call.1} parent=1 // loop_header
      %s17 = sphi 0, %s21
      %p18 = scmp.ge.s32.totalorder %s17, 4
      %s27 = sphi 0, %s29
      %s30 = sphi 0, %s27
      %s31 = sphi 0, %s30
      %s47 = sphi 0, %s31
      %s53 = sphi 0, %s55
      %s56 = sphi 0, %s53
      %s57 = sphi 0, %s56
      %s73 = sphi 0, %s57
      %s79 = sphi 0, %s81
      %s82 = sphi 0, %s79
      %s83 = sphi 0, %s82
      %s99 = sphi 0, %s83
    $region4: #{tpu_custom_call.1} parent=1 // loop_header_branch
      %20 = sbr.rel (%p18) target = $region8
    $region5: #{tpu_custom_call.1} parent=1 // loop_body
      %s22 = ssub.s32 %s17, 1
      %s23 = ssub.s32 %s17, 2
      %s24 = sadd.s32 %s17, 1
      %s25 = ssub.s32 %s17, %s24
      %p26 = scmp.eq.s32.totalorder %s25, 0
      %s28 = sadd.s32 %s27, 1
      %s29 = scalar_select %p26, %s27, %s28
      %p32 = pneg %p26
      %p33 = scmp.eq.s32.totalorder %s17, 1
      %p34 = por %p32, %p33
      %p35 = scmp.ne.s32.totalorder %s27, %s30
      %p36 = scmp.eq.s32.totalorder %s17, 0
      %p37 = por %p35, %p36
      %p38 = scmp.ne.s32.totalorder %s27, %s30
      %p39 = scmp.eq.s32.totalorder %s22, 1
      %p40 = por %p38, %p39
      %p41 = scmp.ne.s32.totalorder %s30, %s31
      %p42 = scmp.eq.s32.totalorder %s22, 0
      %p43 = por %p41, %p42
      %p44 = scmp.ne.s32.totalorder %s30, %s31
      %p45 = scmp.eq.s32.totalorder %s23, 1
      %p46 = por %p44, %p45
      %p48 = scmp.ne.s32.totalorder %s31, %s47
      %p49 = scmp.eq.s32.totalorder %s23, 0
      %p50 = por %p48, %p49
      %s51 = ssub.s32 %s17, %s24
      %p52 = scmp.eq.s32.totalorder %s51, 0
      %s54 = sadd.s32 %s53, 1
      %s55 = scalar_select %p52, %s53, %s54
      %p58 = pneg %p52
      %p59 = scmp.eq.s32.totalorder %s17, 1
      %p60 = por %p58, %p59
      %p61 = scmp.ne.s32.totalorder %s53, %s56
      %p62 = scmp.eq.s32.totalorder %s17, 0
      %p63 = por %p61, %p62
      %p64 = scmp.ne.s32.totalorder %s53, %s56
      %p65 = scmp.eq.s32.totalorder %s22, 1
      %p66 = por %p64, %p65
      %p67 = scmp.ne.s32.totalorder %s56, %s57
      %p68 = scmp.eq.s32.totalorder %s22, 0
      %p69 = por %p67, %p68
      %p70 = scmp.ne.s32.totalorder %s56, %s57
      %p71 = scmp.eq.s32.totalorder %s23, 1
      %p72 = por %p70, %p71
      %p74 = scmp.ne.s32.totalorder %s57, %s73
      %p75 = scmp.eq.s32.totalorder %s23, 0
      %p76 = por %p74, %p75
      %s77 = ssub.s32 %s17, %s24
      %p78 = scmp.eq.s32.totalorder %s77, 0
      %s80 = sadd.s32 %s79, 1
      %s81 = scalar_select %p78, %s79, %s80
      %p84 = pneg %p78
      %p85 = scmp.eq.s32.totalorder %s17, 1
      %p86 = por %p84, %p85
      %p87 = scmp.ne.s32.totalorder %s79, %s82
      %p88 = scmp.eq.s32.totalorder %s17, 0
      %p89 = por %p87, %p88
      %p90 = scmp.ne.s32.totalorder %s79, %s82
      %p91 = scmp.eq.s32.totalorder %s22, 1
      %p92 = por %p90, %p91
      %p93 = scmp.ne.s32.totalorder %s82, %s83
      %p94 = scmp.eq.s32.totalorder %s22, 0
      %p95 = por %p93, %p94
      %p96 = scmp.ne.s32.totalorder %s82, %s83
      %p97 = scmp.eq.s32.totalorder %s23, 1
      %p98 = por %p96, %p97
      %p100 = scmp.ne.s32.totalorder %s83, %s99
      %p101 = scmp.eq.s32.totalorder %s23, 0
      %p102 = por %p100, %p101
      %p103 = scmp.le.s32.totalorder 1, %s17
      %p104 = scmp.lt.s32.totalorder %s17, 3
      %p105 = pnand %p103, %p104
      %p106 = pneg %p105
      // Predicated region
      $region9: #{tpu_custom_call.1} parent=5 // pred_check
        _
      $region10: #{tpu_custom_call.1} parent=5 // pred_check_branch
        %108 = sbr.rel (%p105) target = $region12
      $region11: #{tpu_custom_call.1} parent=5 // pred_region
        %s109 = ssub.s32 %s17, 1
      $region12: #{tpu_custom_call.1} parent=5 // pred_fallthru
        _
      %p110 = scmp.lt.s32.totalorder %s17, 2
      // Predicated region
      $region13: #{tpu_custom_call.1} parent=5 // pred_check
        %p111 = pneg %p110
      $region14: #{tpu_custom_call.1} parent=5 // pred_check_branch
        %113 = sbr.rel (%p111) target = $region16
      $region15: #{tpu_custom_call.1} parent=5 // pred_region
        // Predicated region
        $region17: #{tpu_custom_call.1} parent=15 // pred_check
          %p114 = pneg %p37
        $region18: #{tpu_custom_call.1} parent=15 // pred_check_branch
          %116 = sbr.rel (%p114) target = $region20
        $region19: #{tpu_custom_call.1} parent=15 // pred_region
          %s117 = sand.u32 %s27, 1
          %s118 = scalar_lea.sflag [#allocation3], %s117
          %s119 = sand.u32 %s27, 1
          %s120 = smul.addr %s119, 64
          %s121 = scalar_lea.vmem [#allocation2], %s120
          %123 = vsyncadd %s118, 0
          %s124 = smul.addr %s17, 8
          %s125 = scalar_lea.hbm %s0, %s124
          %s126 = sshll.u32 %s125, 4
          %s127 = int_to_ptr.hbm [resolvable:$true] %s126
          %s128 = sshll.u32 %s121, 4
          %s129 = int_to_ptr.vmem [resolvable:$true] %s128
          %134 = dma.hbm_to_vmem [thread:$0]  %s127, 1024, %s129, %s118, 256, 128, 8
        $region20: #{tpu_custom_call.1} parent=15 // pred_fallthru
          _
        // Predicated region
        $region21: #{tpu_custom_call.1} parent=15 // pred_check
          %p135 = pneg %p63
        $region22: #{tpu_custom_call.1} parent=15 // pred_check_branch
          %137 = sbr.rel (%p135) target = $region24
        $region23: #{tpu_custom_call.1} parent=15 // pred_region
          #allocation9 [shape = 'u32[6]{0}', space=smem, size = 0x18, scoped, tag = 'DMA stride descriptor']
          %s138 = sand.u32 %s53, 1
          %s139 = scalar_lea.sflag [#allocation6], %s138
          %s140 = sand.u32 %s53, 1
          %s141 = smul.addr %s140, 128
          %s142 = scalar_lea.vmem [#allocation5], %s141
          %s143 = smul.u32 4, %s17
          %145 = vsyncadd %s139, 0
          %s146 = smul.addr %s143, 4
          %s147 = scalar_lea.hbm %s1, %s146
          %s149 = sshll.u32 1, 14
          %s150 = sxor.u32 4294967295, %s149
          %s152 = sld [smem:[#allocation0]]
          %s153 = sadd.s32 2, %s152
          %s155 = sshll.u32 7, 26
          %s156 = sxor.u32 4294967295, %s155
          %s157 = sand.u32 0, %s156
          %s158 = sshll.u32 %s153, 26
          %s159 = sor.u32 %s157, %s158
          %s160 = sshll.u32 %s147, 4
          %s161 = int_to_ptr.hbm [resolvable:$true] %s160
          %s162 = sshll.u32 %s142, 4
          %s163 = int_to_ptr.vmem [resolvable:$true] %s162
          %169 = sst [smem:[#allocation9]] 512
          %s170 = scalar_lea.smem [#allocation9], 1
          %171 = sst [smem:[%s170]] 256
          %s172 = scalar_lea.smem [#allocation9], 2
          %173 = sst [smem:[%s172]] 4
          %s174 = scalar_lea.smem [#allocation9], 3
          %175 = sst [smem:[%s174]] 64
          %s176 = scalar_lea.smem [#allocation9], 4
          %177 = sst [smem:[%s176]] 64
          %s178 = scalar_lea.smem [#allocation9], 5
          %179 = sst [smem:[%s178]] 4
          %181 = dma.general %s161, 2048, %s163, %s139, [#allocation8], [#allocation9], %s159, 0
        $region24: #{tpu_custom_call.1} parent=15 // pred_fallthru
          _
      $region16: #{tpu_custom_call.1} parent=5 // pred_fallthru
        _
      %p182 = scmp.le.s32.totalorder 1, %s17
      %p183 = scmp.lt.s32.totalorder %s17, 3
      %p184 = pnand %p182, %p183
      %p185 = pneg %p184
      // Predicated region
      $region25: #{tpu_custom_call.1} parent=5 // pred_check
        _
      $region26: #{tpu_custom_call.1} parent=5 // pred_check_branch
        %187 = sbr.rel (%p184) target = $region28
      $region27: #{tpu_custom_call.1} parent=5 // pred_region
        %s188 = ssub.s32 %s17, 1
        %s189 = sand.u32 %s30, 1
        %s190 = scalar_lea.sflag [#allocation3], %s189
        %s191 = sand.u32 %s30, 1
        %s192 = smul.addr %s191, 64
        %s193 = scalar_lea.vmem [#allocation2], %s192
        // Predicated region
        $region29: #{tpu_custom_call.1} parent=27 // pred_check
          %p194 = pneg %p43
        $region30: #{tpu_custom_call.1} parent=27 // pred_check_branch
          %196 = sbr.rel (%p194) target = $region32
        $region31: #{tpu_custom_call.1} parent=27 // pred_region
          %198 = dma.done %s190, 1024
        $region32: #{tpu_custom_call.1} parent=27 // pred_fallthru
          _
        %s199 = sand.u32 %s56, 1
        %s200 = scalar_lea.sflag [#allocation6], %s199
        %s201 = sand.u32 %s56, 1
        %s202 = smul.addr %s201, 128
        %s203 = scalar_lea.vmem [#allocation5], %s202
        // Predicated region
        $region33: #{tpu_custom_call.1} parent=27 // pred_check
          %p204 = pneg %p69
        $region34: #{tpu_custom_call.1} parent=27 // pred_check_branch
          %206 = sbr.rel (%p204) target = $region36
        $region35: #{tpu_custom_call.1} parent=27 // pred_region
          %208 = dma.done %s200, 2048
        $region36: #{tpu_custom_call.1} parent=27 // pred_fallthru
          _
        %s209 = sand.u32 %s30, 1
        %s210 = scalar_lea.sflag [#allocation3], %s209
        %s211 = sand.u32 %s30, 1
        %s212 = smul.addr %s211, 64
        %s213 = scalar_lea.vmem [#allocation2], %s212
        %p214 = pneg %p43
        %p215 = pneg %p40
        %s216 = sand.u32 %s56, 1
        %s217 = scalar_lea.sflag [#allocation6], %s216
        %s218 = sand.u32 %s56, 1
        %s219 = smul.addr %s218, 128
        %s220 = scalar_lea.vmem [#allocation5], %s219
        %p221 = pneg %p69
        %p222 = pneg %p66
        %p223 = pneg %p95
        %p224 = pneg %p92
        %s225 = sand.u32 %s82, 1
        %s226 = scalar_lea.sflag [#allocation4], %s225
        %s227 = sand.u32 %s82, 1
        %s228 = smul.addr %s227, 8
        %s229 = scalar_lea.vmem [#allocation7], %s228
        %s230 = smul.u32 4, %s22
        %v231 = vld [vmem:[%s193] sm:$0xff]
        %v232 = vld [vmem:[%s193 + $0x8] sm:$0xff]
        %v233 = vld [vmem:[%s193 + $0x10] sm:$0xff]
        %v234 = vld [vmem:[%s193 + $0x18] sm:$0xff]
        %v235 = vld [vmem:[%s193 + $0x20] sm:$0xff]
        %v236 = vld [vmem:[%s193 + $0x28] sm:$0xff]
        %v237 = vld [vmem:[%s193 + $0x30] sm:$0xff]
        %v238 = vld [vmem:[%s193 + $0x38] sm:$0xff]
        %v239 = vunpack.c.0.s8 %v231
        %v240 = vunpack.c.1.s8 %v231
        %v241 = vunpack.c.2.s8 %v231
        %v242 = vunpack.c.3.s8 %v231
        %v243 = vunpack.c.0.s8 %v232
        %v244 = vunpack.c.1.s8 %v232
        %v245 = vunpack.c.2.s8 %v232
        %v246 = vunpack.c.3.s8 %v232
        %v247 = vunpack.c.0.s8 %v233
        %v248 = vunpack.c.1.s8 %v233
        %v249 = vunpack.c.2.s8 %v233
        %v250 = vunpack.c.3.s8 %v233
        %v251 = vunpack.c.0.s8 %v234
        %v252 = vunpack.c.1.s8 %v234
        %v253 = vunpack.c.2.s8 %v234
        %v254 = vunpack.c.3.s8 %v234
        %v255 = vunpack.c.0.s8 %v235
        %v256 = vunpack.c.1.s8 %v235
        %v257 = vunpack.c.2.s8 %v235
        %v258 = vunpack.c.3.s8 %v235
        %v259 = vunpack.c.0.s8 %v236
        %v260 = vunpack.c.1.s8 %v236
        %v261 = vunpack.c.2.s8 %v236
        %v262 = vunpack.c.3.s8 %v236
        %v263 = vunpack.c.0.s8 %v237
        %v264 = vunpack.c.1.s8 %v237
        %v265 = vunpack.c.2.s8 %v237
        %v266 = vunpack.c.3.s8 %v237
        %v267 = vunpack.c.0.s8 %v238
        %v268 = vunpack.c.1.s8 %v238
        %v269 = vunpack.c.2.s8 %v238
        %v270 = vunpack.c.3.s8 %v238
        %v271 = vcvt.s32.f32 %v239
        %v272 = vcvt.s32.f32 %v240
        %v273 = vcvt.s32.f32 %v241
        %v274 = vcvt.s32.f32 %v242
        %v275 = vcvt.s32.f32 %v243
        %v276 = vcvt.s32.f32 %v244
        %v277 = vcvt.s32.f32 %v245
        %v278 = vcvt.s32.f32 %v246
        %v279 = vcvt.s32.f32 %v247
        %v280 = vcvt.s32.f32 %v248
        %v281 = vcvt.s32.f32 %v249
        %v282 = vcvt.s32.f32 %v250
        %v283 = vcvt.s32.f32 %v251
        %v284 = vcvt.s32.f32 %v252
        %v285 = vcvt.s32.f32 %v253
        %v286 = vcvt.s32.f32 %v254
        %v287 = vcvt.s32.f32 %v255
        %v288 = vcvt.s32.f32 %v256
        %v289 = vcvt.s32.f32 %v257
        %v290 = vcvt.s32.f32 %v258
        %v291 = vcvt.s32.f32 %v259
        %v292 = vcvt.s32.f32 %v260
        %v293 = vcvt.s32.f32 %v261
        %v294 = vcvt.s32.f32 %v262
        %v295 = vcvt.s32.f32 %v263
        %v296 = vcvt.s32.f32 %v264
        %v297 = vcvt.s32.f32 %v265
        %v298 = vcvt.s32.f32 %v266
        %v299 = vcvt.s32.f32 %v267
        %v300 = vcvt.s32.f32 %v268
        %v301 = vcvt.s32.f32 %v269
        %v302 = vcvt.s32.f32 %v270
        %v303 = vld [vmem:[%s203] sm:$0xf]
        %v304 = vld [vmem:[%s203 + $0x4] sm:$0xf]
        %v305 = vld [vmem:[%s203 + $0x8] sm:$0xf]
        %v306 = vld [vmem:[%s203 + $0xc] sm:$0xf]
        %v307 = vld [vmem:[%s203 + $0x10] sm:$0xf]
        %v308 = vld [vmem:[%s203 + $0x14] sm:$0xf]
        %v309 = vld [vmem:[%s203 + $0x18] sm:$0xf]
        %v310 = vld [vmem:[%s203 + $0x1c] sm:$0xf]
        %v311 = vld [vmem:[%s203 + $0x20] sm:$0xf]
        %v312 = vld [vmem:[%s203 + $0x24] sm:$0xf]
        %v313 = vld [vmem:[%s203 + $0x28] sm:$0xf]
        %v314 = vld [vmem:[%s203 + $0x2c] sm:$0xf]
        %v315 = vld [vmem:[%s203 + $0x30] sm:$0xf]
        %v316 = vld [vmem:[%s203 + $0x34] sm:$0xf]
        %v317 = vld [vmem:[%s203 + $0x38] sm:$0xf]
        %v318 = vld [vmem:[%s203 + $0x3c] sm:$0xf]
        %v319 = vld [vmem:[%s203 + $0x40] sm:$0xf]
        %v320 = vld [vmem:[%s203 + $0x44] sm:$0xf]
        %v321 = vld [vmem:[%s203 + $0x48] sm:$0xf]
        %v322 = vld [vmem:[%s203 + $0x4c] sm:$0xf]
        %v323 = vld [vmem:[%s203 + $0x50] sm:$0xf]
        %v324 = vld [vmem:[%s203 + $0x54] sm:$0xf]
        %v325 = vld [vmem:[%s203 + $0x58] sm:$0xf]
        %v326 = vld [vmem:[%s203 + $0x5c] sm:$0xf]
        %v327 = vld [vmem:[%s203 + $0x60] sm:$0xf]
        %v328 = vld [vmem:[%s203 + $0x64] sm:$0xf]
        %v329 = vld [vmem:[%s203 + $0x68] sm:$0xf]
        %v330 = vld [vmem:[%s203 + $0x6c] sm:$0xf]
        %v331 = vld [vmem:[%s203 + $0x70] sm:$0xf]
        %v332 = vld [vmem:[%s203 + $0x74] sm:$0xf]
        %v333 = vld [vmem:[%s203 + $0x78] sm:$0xf]
        %v334 = vld [vmem:[%s203 + $0x7c] sm:$0xf]
        %v335 = vunpack.c.l.bf16 %v303
        %v336 = vunpack.c.l.bf16 %v304
        %v337 = vunpack.c.l.bf16 %v305
        %v338 = vunpack.c.l.bf16 %v306
        %v339 = vunpack.c.l.bf16 %v307
        %v340 = vunpack.c.l.bf16 %v308
        %v341 = vunpack.c.l.bf16 %v309
        %v342 = vunpack.c.l.bf16 %v310
        %v343 = vunpack.c.l.bf16 %v311
        %v344 = vunpack.c.l.bf16 %v312
        %v345 = vunpack.c.l.bf16 %v313
        %v346 = vunpack.c.l.bf16 %v314
        %v347 = vunpack.c.l.bf16 %v315
        %v348 = vunpack.c.l.bf16 %v316
        %v349 = vunpack.c.l.bf16 %v317
        %v350 = vunpack.c.l.bf16 %v318
        %v351 = vunpack.c.l.bf16 %v319
        %v352 = vunpack.c.l.bf16 %v320
        %v353 = vunpack.c.l.bf16 %v321
        %v354 = vunpack.c.l.bf16 %v322
        %v355 = vunpack.c.l.bf16 %v323
        %v356 = vunpack.c.l.bf16 %v324
        %v357 = vunpack.c.l.bf16 %v325
        %v358 = vunpack.c.l.bf16 %v326
        %v359 = vunpack.c.l.bf16 %v327
        %v360 = vunpack.c.l.bf16 %v328
        %v361 = vunpack.c.l.bf16 %v329
        %v362 = vunpack.c.l.bf16 %v330
        %v363 = vunpack.c.l.bf16 %v331
        %v364 = vunpack.c.l.bf16 %v332
        %v365 = vunpack.c.l.bf16 %v333
        %v366 = vunpack.c.l.bf16 %v334
        %v367 = vmax.f32 %v335, 1e-07
        %v368 = vmax.f32 %v336, 1e-07
        %v369 = vmax.f32 %v337, 1e-07
        %v370 = vmax.f32 %v338, 1e-07
        %v371 = vmax.f32 %v339, 1e-07
        %v372 = vmax.f32 %v340, 1e-07
        %v373 = vmax.f32 %v341, 1e-07
        %v374 = vmax.f32 %v342, 1e-07
        %v375 = vmax.f32 %v343, 1e-07
        %v376 = vmax.f32 %v344, 1e-07
        %v377 = vmax.f32 %v345, 1e-07
        %v378 = vmax.f32 %v346, 1e-07
        %v379 = vmax.f32 %v347, 1e-07
        %v380 = vmax.f32 %v348, 1e-07
        %v381 = vmax.f32 %v349, 1e-07
        %v382 = vmax.f32 %v350, 1e-07
        %v383 = vmax.f32 %v351, 1e-07
        %v384 = vmax.f32 %v352, 1e-07
        %v385 = vmax.f32 %v353, 1e-07
        %v386 = vmax.f32 %v354, 1e-07
        %v387 = vmax.f32 %v355, 1e-07
        %v388 = vmax.f32 %v356, 1e-07
        %v389 = vmax.f32 %v357, 1e-07
        %v390 = vmax.f32 %v358, 1e-07
        %v391 = vmax.f32 %v359, 1e-07
        %v392 = vmax.f32 %v360, 1e-07
        %v393 = vmax.f32 %v361, 1e-07
        %v394 = vmax.f32 %v362, 1e-07
        %v395 = vmax.f32 %v363, 1e-07
        %v396 = vmax.f32 %v364, 1e-07
        %v397 = vmax.f32 %v365, 1e-07
        %v398 = vmax.f32 %v366, 1e-07
        %v399 = vmin.f32 %v367, 0.9999999
        %v400 = vmin.f32 %v368, 0.9999999
        %v401 = vmin.f32 %v369, 0.9999999
        %v402 = vmin.f32 %v370, 0.9999999
        %v403 = vmin.f32 %v371, 0.9999999
        %v404 = vmin.f32 %v372, 0.9999999
        %v405 = vmin.f32 %v373, 0.9999999
        %v406 = vmin.f32 %v374, 0.9999999
        %v407 = vmin.f32 %v375, 0.9999999
        %v408 = vmin.f32 %v376, 0.9999999
        %v409 = vmin.f32 %v377, 0.9999999
        %v410 = vmin.f32 %v378, 0.9999999
        %v411 = vmin.f32 %v379, 0.9999999
        %v412 = vmin.f32 %v380, 0.9999999
        %v413 = vmin.f32 %v381, 0.9999999
        %v414 = vmin.f32 %v382, 0.9999999
        %v415 = vmin.f32 %v383, 0.9999999
        %v416 = vmin.f32 %v384, 0.9999999
        %v417 = vmin.f32 %v385, 0.9999999
        %v418 = vmin.f32 %v386, 0.9999999
        %v419 = vmin.f32 %v387, 0.9999999
        %v420 = vmin.f32 %v388, 0.9999999
        %v421 = vmin.f32 %v389, 0.9999999
        %v422 = vmin.f32 %v390, 0.9999999
        %v423 = vmin.f32 %v391, 0.9999999
        %v424 = vmin.f32 %v392, 0.9999999
        %v425 = vmin.f32 %v393, 0.9999999
        %v426 = vmin.f32 %v394, 0.9999999
        %v427 = vmin.f32 %v395, 0.9999999
        %v428 = vmin.f32 %v396, 0.9999999
        %v429 = vmin.f32 %v397, 0.9999999
        %v430 = vmin.f32 %v398, 0.9999999
        %v431 = vadd.f32 %v271, %v275
        %v432 = vadd.f32 %v431, %v279
        %v433 = vadd.f32 %v432, %v283
        %v434 = vadd.f32 %v272, %v276
        %v435 = vadd.f32 %v434, %v280
        %v436 = vadd.f32 %v435, %v284
        %v437 = vadd.f32 %v273, %v277
        %v438 = vadd.f32 %v437, %v281
        %v439 = vadd.f32 %v438, %v285
        %v440 = vadd.f32 %v274, %v278
        %v441 = vadd.f32 %v440, %v282
        %v442 = vadd.f32 %v441, %v286
        %vm443 = vcmp.eq.f32.partialorder %v433, 1.0
        %vm444 = vcmp.eq.f32.partialorder %v436, 1.0
        %vm445 = vcmp.eq.f32.partialorder %v439, 1.0
        %vm446 = vcmp.eq.f32.partialorder %v442, 1.0
        %v447 = vsel %vm443, 0.75, 0.25
        %v448 = vsel %vm444, 0.75, 0.25
        %v449 = vsel %vm445, 0.75, 0.25
        %v450 = vsel %vm446, 0.75, 0.25
        %vm451 = vcmp.eq.f32.partialorder %v271, 1.0
        %vm452 = vcmp.eq.f32.partialorder %v272, 1.0
        %vm453 = vcmp.eq.f32.partialorder %v273, 1.0
        %vm454 = vcmp.eq.f32.partialorder %v274, 1.0
        %vm455 = vcmp.eq.f32.partialorder %v275, 1.0
        %vm456 = vcmp.eq.f32.partialorder %v276, 1.0
        %vm457 = vcmp.eq.f32.partialorder %v277, 1.0
        %vm458 = vcmp.eq.f32.partialorder %v278, 1.0
        %vm459 = vcmp.eq.f32.partialorder %v279, 1.0
        %vm460 = vcmp.eq.f32.partialorder %v280, 1.0
        %vm461 = vcmp.eq.f32.partialorder %v281, 1.0
        %vm462 = vcmp.eq.f32.partialorder %v282, 1.0
        %vm463 = vcmp.eq.f32.partialorder %v283, 1.0
        %vm464 = vcmp.eq.f32.partialorder %v284, 1.0
        %vm465 = vcmp.eq.f32.partialorder %v285, 1.0
        %vm466 = vcmp.eq.f32.partialorder %v286, 1.0
        %vm467 = vcmp.eq.f32.partialorder %v287, 1.0
        %vm468 = vcmp.eq.f32.partialorder %v288, 1.0
        %vm469 = vcmp.eq.f32.partialorder %v289, 1.0
        %vm470 = vcmp.eq.f32.partialorder %v290, 1.0
        %vm471 = vcmp.eq.f32.partialorder %v291, 1.0
        %vm472 = vcmp.eq.f32.partialorder %v292, 1.0
        %vm473 = vcmp.eq.f32.partialorder %v293, 1.0
        %vm474 = vcmp.eq.f32.partialorder %v294, 1.0
        %vm475 = vcmp.eq.f32.partialorder %v295, 1.0
        %vm476 = vcmp.eq.f32.partialorder %v296, 1.0
        %vm477 = vcmp.eq.f32.partialorder %v297, 1.0
        %vm478 = vcmp.eq.f32.partialorder %v298, 1.0
        %vm479 = vcmp.eq.f32.partialorder %v299, 1.0
        %vm480 = vcmp.eq.f32.partialorder %v300, 1.0
        %vm481 = vcmp.eq.f32.partialorder %v301, 1.0
        %vm482 = vcmp.eq.f32.partialorder %v302, 1.0
        %v483 = vsub.f32 1.0, %v399
        %v484 = vsub.f32 1.0, %v400
        %v485 = vsub.f32 1.0, %v401
        %v486 = vsub.f32 1.0, %v402
        %v487 = vsub.f32 1.0, %v403
        %v488 = vsub.f32 1.0, %v404
        %v489 = vsub.f32 1.0, %v405
        %v490 = vsub.f32 1.0, %v406
        %v491 = vsub.f32 1.0, %v407
        %v492 = vsub.f32 1.0, %v408
        %v493 = vsub.f32 1.0, %v409
        %v494 = vsub.f32 1.0, %v410
        %v495 = vsub.f32 1.0, %v411
        %v496 = vsub.f32 1.0, %v412
        %v497 = vsub.f32 1.0, %v413
        %v498 = vsub.f32 1.0, %v414
        %v499 = vsub.f32 1.0, %v415
        %v500 = vsub.f32 1.0, %v416
        %v501 = vsub.f32 1.0, %v417
        %v502 = vsub.f32 1.0, %v418
        %v503 = vsub.f32 1.0, %v419
        %v504 = vsub.f32 1.0, %v420
        %v505 = vsub.f32 1.0, %v421
        %v506 = vsub.f32 1.0, %v422
        %v507 = vsub.f32 1.0, %v423
        %v508 = vsub.f32 1.0, %v424
        %v509 = vsub.f32 1.0, %v425
        %v510 = vsub.f32 1.0, %v426
        %v511 = vsub.f32 1.0, %v427
        %v512 = vsub.f32 1.0, %v428
        %v513 = vsub.f32 1.0, %v429
        %v514 = vsub.f32 1.0, %v430
        %v515 = vsel %vm451, %v399, %v483
        %v516 = vsel %vm452, %v400, %v484
        %v517 = vsel %vm453, %v401, %v485
        %v518 = vsel %vm454, %v402, %v486
        %v519 = vsel %vm455, %v403, %v487
        %v520 = vsel %vm456, %v404, %v488
        %v521 = vsel %vm457, %v405, %v489
        %v522 = vsel %vm458, %v406, %v490
        %v523 = vsel %vm459, %v407, %v491
        %v524 = vsel %vm460, %v408, %v492
        %v525 = vsel %vm461, %v409, %v493
        %v526 = vsel %vm462, %v410, %v494
        %v527 = vsel %vm463, %v411, %v495
        %v528 = vsel %vm464, %v412, %v496
        %v529 = vsel %vm465, %v413, %v497
        %v530 = vsel %vm466, %v414, %v498
        %v531 = vsel %vm467, %v415, %v499
        %v532 = vsel %vm468, %v416, %v500
        %v533 = vsel %vm469, %v417, %v501
        %v534 = vsel %vm470, %v418, %v502
        %v535 = vsel %vm471, %v419, %v503
        %v536 = vsel %vm472, %v420, %v504
        %v537 = vsel %vm473, %v421, %v505
        %v538 = vsel %vm474, %v422, %v506
        %v539 = vsel %vm475, %v423, %v507
        %v540 = vsel %vm476, %v424, %v508
        %v541 = vsel %vm477, %v425, %v509
        %v542 = vsel %vm478, %v426, %v510
        %v543 = vsel %vm479, %v427, %v511
        %v544 = vsel %vm480, %v428, %v512
        %v545 = vsel %vm481, %v429, %v513
        %v546 = vsel %vm482, %v430, %v514
        %v547 = vsub.f32 1.0, %v515
        %v548 = vsub.f32 1.0, %v516
        %v549 = vsub.f32 1.0, %v517
        %v550 = vsub.f32 1.0, %v518
        %v551 = vsub.f32 1.0, %v519
        %v552 = vsub.f32 1.0, %v520
        %v553 = vsub.f32 1.0, %v521
        %v554 = vsub.f32 1.0, %v522
        %v555 = vsub.f32 1.0, %v523
        %v556 = vsub.f32 1.0, %v524
        %v557 = vsub.f32 1.0, %v525
        %v558 = vsub.f32 1.0, %v526
        %v559 = vsub.f32 1.0, %v527
        %v560 = vsub.f32 1.0, %v528
        %v561 = vsub.f32 1.0, %v529
        %v562 = vsub.f32 1.0, %v530
        %v563 = vsub.f32 1.0, %v531
        %v564 = vsub.f32 1.0, %v532
        %v565 = vsub.f32 1.0, %v533
        %v566 = vsub.f32 1.0, %v534
        %v567 = vsub.f32 1.0, %v535
        %v568 = vsub.f32 1.0, %v536
        %v569 = vsub.f32 1.0, %v537
        %v570 = vsub.f32 1.0, %v538
        %v571 = vsub.f32 1.0, %v539
        %v572 = vsub.f32 1.0, %v540
        %v573 = vsub.f32 1.0, %v541
        %v574 = vsub.f32 1.0, %v542
        %v575 = vsub.f32 1.0, %v543
        %v576 = vsub.f32 1.0, %v544
        %v577 = vsub.f32 1.0, %v545
        %v578 = vsub.f32 1.0, %v546
        %v579 = vmul.f32 %v547, %v547
        %v580 = vmul.f32 %v548, %v548
        %v581 = vmul.f32 %v549, %v549
        %v582 = vmul.f32 %v550, %v550
        %v583 = vmul.f32 %v551, %v551
        %v584 = vmul.f32 %v552, %v552
        %v585 = vmul.f32 %v553, %v553
        %v586 = vmul.f32 %v554, %v554
        %v587 = vmul.f32 %v555, %v555
        %v588 = vmul.f32 %v556, %v556
        %v589 = vmul.f32 %v557, %v557
        %v590 = vmul.f32 %v558, %v558
        %v591 = vmul.f32 %v559, %v559
        %v592 = vmul.f32 %v560, %v560
        %v593 = vmul.f32 %v561, %v561
        %v594 = vmul.f32 %v562, %v562
        %v595 = vmul.f32 %v563, %v563
        %v596 = vmul.f32 %v564, %v564
        %v597 = vmul.f32 %v565, %v565
        %v598 = vmul.f32 %v566, %v566
        %v599 = vmul.f32 %v567, %v567
        %v600 = vmul.f32 %v568, %v568
        %v601 = vmul.f32 %v569, %v569
        %v602 = vmul.f32 %v570, %v570
        %v603 = vmul.f32 %v571, %v571
        %v604 = vmul.f32 %v572, %v572
        %v605 = vmul.f32 %v573, %v573
        %v606 = vmul.f32 %v574, %v574
        %v607 = vmul.f32 %v575, %v575
        %v608 = vmul.f32 %v576, %v576
        %v609 = vmul.f32 %v577, %v577
        %v610 = vmul.f32 %v578, %v578
        %v611 = vlog2.pop %v515
        %v612 = vmul.f32 %v611, 0.6931472
        %v613 = vlog2.pop %v516
        %v614 = vmul.f32 %v613, 0.6931472
        %v615 = vlog2.pop %v517
        %v616 = vmul.f32 %v615, 0.6931472
        %v617 = vlog2.pop %v518
        %v618 = vmul.f32 %v617, 0.6931472
        %v619 = vlog2.pop %v519
        %v620 = vmul.f32 %v619, 0.6931472
        %v621 = vlog2.pop %v520
        %v622 = vmul.f32 %v621, 0.6931472
        %v623 = vlog2.pop %v521
        %v624 = vmul.f32 %v623, 0.6931472
        %v625 = vlog2.pop %v522
        %v626 = vmul.f32 %v625, 0.6931472
        %v627 = vlog2.pop %v523
        %v628 = vmul.f32 %v627, 0.6931472
        %v629 = vlog2.pop %v524
        %v630 = vmul.f32 %v629, 0.6931472
        %v631 = vlog2.pop %v525
        %v632 = vmul.f32 %v631, 0.6931472
        %v633 = vlog2.pop %v526
        %v634 = vmul.f32 %v633, 0.6931472
        %v635 = vlog2.pop %v527
        %v636 = vmul.f32 %v635, 0.6931472
        %v637 = vlog2.pop %v528
        %v638 = vmul.f32 %v637, 0.6931472
        %v639 = vlog2.pop %v529
        %v640 = vmul.f32 %v639, 0.6931472
        %v641 = vlog2.pop %v530
        %v642 = vmul.f32 %v641, 0.6931472
        %v643 = vlog2.pop %v531
        %v644 = vmul.f32 %v643, 0.6931472
        %v645 = vlog2.pop %v532
        %v646 = vmul.f32 %v645, 0.6931472
        %v647 = vlog2.pop %v533
        %v648 = vmul.f32 %v647, 0.6931472
        %v649 = vlog2.pop %v534
        %v650 = vmul.f32 %v649, 0.6931472
        %v651 = vlog2.pop %v535
        %v652 = vmul.f32 %v651, 0.6931472
        %v653 = vlog2.pop %v536
        %v654 = vmul.f32 %v653, 0.6931472
        %v655 = vlog2.pop %v537
        %v656 = vmul.f32 %v655, 0.6931472
        %v657 = vlog2.pop %v538
        %v658 = vmul.f32 %v657, 0.6931472
        %v659 = vlog2.pop %v539
        %v660 = vmul.f32 %v659, 0.6931472
        %v661 = vlog2.pop %v540
        %v662 = vmul.f32 %v661, 0.6931472
        %v663 = vlog2.pop %v541
        %v664 = vmul.f32 %v663, 0.6931472
        %v665 = vlog2.pop %v542
        %v666 = vmul.f32 %v665, 0.6931472
        %v667 = vlog2.pop %v543
        %v668 = vmul.f32 %v667, 0.6931472
        %v669 = vlog2.pop %v544
        %v670 = vmul.f32 %v669, 0.6931472
        %v671 = vlog2.pop %v545
        %v672 = vmul.f32 %v671, 0.6931472
        %v673 = vlog2.pop %v546
        %v674 = vmul.f32 %v673, 0.6931472
        %v675 = vmul.f32 %v579, %v612
        %v676 = vmul.f32 %v580, %v614
        %v677 = vmul.f32 %v581, %v616
        %v678 = vmul.f32 %v582, %v618
        %v679 = vmul.f32 %v583, %v620
        %v680 = vmul.f32 %v584, %v622
        %v681 = vmul.f32 %v585, %v624
        %v682 = vmul.f32 %v586, %v626
        %v683 = vmul.f32 %v587, %v628
        %v684 = vmul.f32 %v588, %v630
        %v685 = vmul.f32 %v589, %v632
        %v686 = vmul.f32 %v590, %v634
        %v687 = vmul.f32 %v591, %v636
        %v688 = vmul.f32 %v592, %v638
        %v689 = vmul.f32 %v593, %v640
        %v690 = vmul.f32 %v594, %v642
        %v691 = vmul.f32 %v595, %v644
        %v692 = vmul.f32 %v596, %v646
        %v693 = vmul.f32 %v597, %v648
        %v694 = vmul.f32 %v598, %v650
        %v695 = vmul.f32 %v599, %v652
        %v696 = vmul.f32 %v600, %v654
        %v697 = vmul.f32 %v601, %v656
        %v698 = vmul.f32 %v602, %v658
        %v699 = vmul.f32 %v603, %v660
        %v700 = vmul.f32 %v604, %v662
        %v701 = vmul.f32 %v605, %v664
        %v702 = vmul.f32 %v606, %v666
        %v703 = vmul.f32 %v607, %v668
        %v704 = vmul.f32 %v608, %v670
        %v705 = vmul.f32 %v609, %v672
        %v706 = vmul.f32 %v610, %v674
        %v707 = vadd.f32 %v675, %v679
        %v708 = vadd.f32 %v707, %v683
        %v709 = vadd.f32 %v708, %v687
        %v710 = vadd.f32 %v709, %v691
        %v711 = vadd.f32 %v710, %v695
        %v712 = vadd.f32 %v711, %v699
        %v713 = vadd.f32 %v712, %v703
        %v714 = vadd.f32 %v676, %v680
        %v715 = vadd.f32 %v714, %v684
        %v716 = vadd.f32 %v715, %v688
        %v717 = vadd.f32 %v716, %v692
        %v718 = vadd.f32 %v717, %v696
        %v719 = vadd.f32 %v718, %v700
        %v720 = vadd.f32 %v719, %v704
        %v721 = vadd.f32 %v677, %v681
        %v722 = vadd.f32 %v721, %v685
        %v723 = vadd.f32 %v722, %v689
        %v724 = vadd.f32 %v723, %v693
        %v725 = vadd.f32 %v724, %v697
        %v726 = vadd.f32 %v725, %v701
        %v727 = vadd.f32 %v726, %v705
        %v728 = vadd.f32 %v678, %v682
        %v729 = vadd.f32 %v728, %v686
        %v730 = vadd.f32 %v729, %v690
        %v731 = vadd.f32 %v730, %v694
        %v732 = vadd.f32 %v731, %v698
        %v733 = vadd.f32 %v732, %v702
        %v734 = vadd.f32 %v733, %v706
        %v735 = vmul.f32 %v447, %v713
        %v736 = vmul.f32 %v448, %v720
        %v737 = vmul.f32 %v449, %v727
        %v738 = vmul.f32 %v450, %v734
        %v739 = vadd.f32 %v735, %v736
        %v740 = vadd.f32 %v739, %v737
        %v741 = vadd.f32 %v740, %v738
        %742 = vst [vmem:[%s229] sm:$0xff] %v741
        %s743 = sand.u32 %s82, 1
        %s744 = scalar_lea.sflag [#allocation4], %s743
        %s745 = sand.u32 %s82, 1
        %s746 = smul.addr %s745, 8
        %s747 = scalar_lea.vmem [#allocation7], %s746
        // Predicated region
        $region37: #{tpu_custom_call.1} parent=27 // pred_check
          %p748 = pneg %p92
        $region38: #{tpu_custom_call.1} parent=27 // pred_check_branch
          %750 = sbr.rel (%p748) target = $region40
        $region39: #{tpu_custom_call.1} parent=27 // pred_region
          %752 = vsyncadd %s744, 0
          %s753 = smul.addr %s22, 8
          %s754 = scalar_lea.hbm %s2, %s753
          %s756 = sshll.u32 %s747, 4
          %s757 = int_to_ptr.vmem [resolvable:$true] %s756
          %s758 = sshll.u32 %s754, 4
          %s759 = int_to_ptr.hbm [resolvable:$true] %s758
          %761 = dma.vmem_to_hbm [thread:$0]  %s757, 128, %s759, %s744
        $region40: #{tpu_custom_call.1} parent=27 // pred_fallthru
          _
      $region28: #{tpu_custom_call.1} parent=5 // pred_fallthru
        _
      %p762 = scmp.le.s32.totalorder 2, %s17
      // Predicated region
      $region41: #{tpu_custom_call.1} parent=5 // pred_check
        %p763 = pneg %p762
      $region42: #{tpu_custom_call.1} parent=5 // pred_check_branch
        %765 = sbr.rel (%p763) target = $region44
      $region43: #{tpu_custom_call.1} parent=5 // pred_region
        %s766 = ssub.s32 %s17, 2
        // Predicated region
        $region45: #{tpu_custom_call.1} parent=43 // pred_check
          %p767 = pneg %p98
        $region46: #{tpu_custom_call.1} parent=43 // pred_check_branch
          %769 = sbr.rel (%p767) target = $region48
        $region47: #{tpu_custom_call.1} parent=43 // pred_region
          %s770 = sand.u32 %s83, 1
          %s771 = scalar_lea.sflag [#allocation4], %s770
          %s772 = sand.u32 %s83, 1
          %s773 = smul.addr %s772, 8
          %s774 = scalar_lea.vmem [#allocation7], %s773
          %776 = dma.done %s771, 128
        $region48: #{tpu_custom_call.1} parent=43 // pred_fallthru
          _
      $region44: #{tpu_custom_call.1} parent=5 // pred_fallthru
        _
    $region6: #{tpu_custom_call.1} parent=1 // loop_footer
      %s21 = sadd.s32 1, %s17
    $region7: #{tpu_custom_call.1} parent=1 // loop_footer_branch
      %16 = sbr.rel target = $region3
    $region8: #{tpu_custom_call.1} parent=1 // loop_exit
      _
    %777 = vsyncpa [#allocation3], 1
    %s778 = scalar_lea.sflag [#allocation3], 1
    %779 = vsyncpa %s778, 1
    %780 = vsyncpa [#allocation6], 1
    %s781 = scalar_lea.sflag [#allocation6], 1
    %782 = vsyncpa %s781, 1
    %783 = vsyncpa [#allocation4], 1
    %s784 = scalar_lea.sflag [#allocation4], 1
    %785 = vsyncpa %s784, 1

</llo_original>
